<compile_context>
chip_gen: v6e
topology: v6e:2x2x1
jax: 0.10.0
libtpu: 0.0.40
codegen_flags: <defaults>
</compile_context>

<pallas_src>
import functools

import jax
import jax.numpy as jnp
from jax import lax
from jax.experimental import pallas as pl
from jax.experimental.pallas import tpu as pltpu


def _scores_kernel(v_ref, enc_ref, out_ref):
    # scores tile = v @ enc_tile^T, written without a transpose: contract
    # axis 1 of v (1, H) with axis 1 of enc_tile (ts, H) -> (1, ts) f32,
    # which is exactly the lane-dense output block.
    out_ref[...] = lax.dot_general(
        v_ref[...], enc_ref[...],
        dimension_numbers=(((1,), (1,)), ((), ())),
        preferred_element_type=jnp.float32)


def _pick_tile_rows(S, H, itemsize, target_bytes):
    """Tile rows ~= target_bytes of enc, multiple of 128, not past padded S."""
    row_bytes = max(1, H * itemsize)
    ts = max(128, (target_bytes // row_bytes) // 128 * 128)
    s_pad_min = -(-S // 128) * 128           # round S up to a multiple of 128
    return int(min(ts, s_pad_min))


@functools.partial(jax.jit, static_argnames=("compute_dtype", "target_tile_bytes"))
def attention_general(hidden, encoder_outputs, w, b=None, *,
                      compute_dtype=jnp.bfloat16,
                      target_tile_bytes=6 << 20):
    """Forward of Attention(method='general').

    hidden:          (1, H)
    encoder_outputs: (S, 1, H)
    w:               (H, H)  torch nn.Linear weight layout (out, in)
    b:               (H,)    unused: adds the same constant (hidden.b) to every
                             score, which cancels exactly in softmax.
    Returns (1, 1, S) float32 attention weights.
    """
    del b  # exactly cancels under softmax
    S = encoder_outputs.shape[0]
    H = hidden.shape[-1]

    # Precompute v = hidden @ W in f32 in the wrapper (tiny: 2*H^2 flops).
    # Contracting hidden with W's "out" axis matches hidden @ (enc @ W^T)^T.
    v = jnp.dot(hidden.astype(jnp.float32), w.astype(jnp.float32))   # (1, H)

    cdt = jnp.dtype(compute_dtype)
    enc = encoder_outputs.reshape(S, H).astype(cdt)
    v = v.astype(cdt)

    ts = _pick_tile_rows(S, H, cdt.itemsize, target_tile_bytes)
    S_pad = -(-S // ts) * ts
    if S_pad != S:
        enc = jnp.pad(enc, ((0, S_pad - S), (0, 0)))
    n_tiles = S_pad // ts

    # Scoped VMEM: 2x (double-buffered) enc tile + output blocks + v, with
    # headroom; clamped to stay comfortably inside v7x's 64 MiB physical VMEM.
    tile_bytes = ts * H * cdt.itemsize
    vmem_limit = int(min(max(2 * tile_bytes + 2 * ts * 4 + 4 * H + (4 << 20),
                             16 << 20),
                         48 << 20))

    scores = pl.pallas_call(
        _scores_kernel,
        out_shape=jax.ShapeDtypeStruct((1, S_pad), jnp.float32),
        grid_spec=pltpu.PrefetchScalarGridSpec(
            num_scalar_prefetch=0,
            grid=(n_tiles,),
            in_specs=[
                pl.BlockSpec((1, H), lambda i: (0, 0)),    # v (tiny, resident)
                pl.BlockSpec((ts, H), lambda i: (i, 0)),   # enc (streamed)
            ],
            out_specs=pl.BlockSpec((1, ts), lambda i: (0, i)),
        ),
        compiler_params=pltpu.CompilerParams(
            dimension_semantics=("parallel",),   # no resident accumulator
            vmem_limit_bytes=vmem_limit,
        ),
    )(v, enc)

    # Exact, numerically stable softmax over the true S scores (padding rows
    # are dropped here, so they never influence the result).
    weights = jax.nn.softmax(scores[0, :S].astype(jnp.float32))
    return weights.reshape(1, 1, S)


if __name__ == "__main__":
    H, S = 32, 8
    key = jax.random.PRNGKey(0)
    k1, k2, k3, k4 = jax.random.split(key, 4)

    # Deterministic "module" parameters (nn.Linear(H, H) shapes).
    bound = 1.0 / (H ** 0.5)
    w = jax.random.uniform(k3, (H, H), jnp.float32, -bound, bound)   # (out, in)
    b = jax.random.uniform(k4, (H,), jnp.float32, -bound, bound)

    # Inputs matching the forward's expectations for method='general'.
    hidden = jax.random.normal(k1, (1, H), jnp.float32)
    encoder_outputs = jax.random.normal(k2, (S, 1, H), jnp.float32)

    out = attention_general(hidden, encoder_outputs, w, b)
    out = jax.block_until_ready(out)

    # Pure-JAX f32 reference of the literal PyTorch recipe (bias included --
    # the kernel drops it, which is exact under softmax).
    e_ref = encoder_outputs.reshape(S, H) @ w.T + b           # (S, H)
    scores_ref = (hidden @ e_ref.T).reshape(-1)               # (S,)
    ref = jax.nn.softmax(scores_ref).reshape(1, 1, S)

    assert out.shape == (1, 1, S)
    # bf16 enc/v in the kernel -> allow ~1e-2-level deviation vs f32 reference.
    assert jnp.allclose(out, ref, atol=2e-2, rtol=2e-2), (out, ref)
    assert jnp.allclose(jnp.sum(out), 1.0, atol=1e-5)

    print("KERNEL_OK")
</pallas_src>

<mosaic_0001>
module attributes {stable_mosaic.version = 11 : i64} {
  func.func @_scores_kernel(%arg0: i32, %arg1: memref<1x32xbf16, #tpu.memory_space<vmem>>, %arg2: memref<128x32xbf16, #tpu.memory_space<vmem>>, %arg3: memref<1x128xf32, #tpu.memory_space<vmem>>) attributes {dimension_semantics = [#tpu.dimension_semantics<parallel>], iteration_bounds = array<i64: 1>, scalar_prefetch = 0 : i64, scratch_operands = 0 : i64, tpu.core_type = #tpu.core_type<tc>, window_params = [{pipeline_mode = #tpu.pipeline_mode<synchronous>, transform_indices = @transform_0, window_bounds = array<i64: 1, 32>}, {transform_indices = @transform_1, window_bounds = array<i64: 128, 32>}, {transform_indices = @transform_2, window_bounds = array<i64: 1, 128>}]} {
    %c0 = arith.constant 0 : index
    %c0_0 = arith.constant 0 : index
    %0 = vector.load %arg1[%c0, %c0_0] : memref<1x32xbf16, #tpu.memory_space<vmem>>, vector<1x32xbf16>
    %c0_1 = arith.constant 0 : index
    %c0_2 = arith.constant 0 : index
    %1 = vector.load %arg2[%c0_1, %c0_2] : memref<128x32xbf16, #tpu.memory_space<vmem>>, vector<128x32xbf16>
    %cst = arith.constant dense<0.000000e+00> : vector<1x128xf32>
    %2 = tpu.matmul %0, %1, %cst {dimension_numbers = #tpu.dot_dimension_numbers<[1], [1], [0], [0], [0, 0, 1, 0], [], []>} : vector<1x32xbf16>, vector<128x32xbf16>, vector<1x128xf32> -> vector<1x128xf32>
    %c0_3 = arith.constant 0 : index
    %c0_4 = arith.constant 0 : index
    %3 = vector.load %arg3[%c0_3, %c0_4] : memref<1x128xf32, #tpu.memory_space<vmem>>, vector<1x128xf32>
    tpu.vector_store %arg3[%c0_3, %c0_4], %2 {strides = array<i32>} : memref<1x128xf32, #tpu.memory_space<vmem>>, vector<1x128xf32>,
    return
  }
  func.func @transform_0(%arg0: i32) -> (i32, i32) {
    %c0_i32 = arith.constant 0 : i32
    %c0_i32_0 = arith.constant 0 : i32
    %c0_i32_1 = arith.constant 0 : i32
    return %c0_i32, %c0_i32_0 : i32, i32
  }
  func.func @transform_1(%arg0: i32) -> (i32, i32) {
    %c0_i32 = arith.constant 0 : i32
    %c0_i32_0 = arith.constant 0 : i32
    return %arg0, %c0_i32 : i32, i32
  }
  func.func @transform_2(%arg0: i32) -> (i32, i32) {
    %c0_i32 = arith.constant 0 : i32
    %c0_i32_0 = arith.constant 0 : i32
    return %c0_i32, %arg0 : i32, i32
  }
}

</mosaic_0001>

<llo_original>
// kernel: attention_general.1
$region0: #{attention_general.1}
  #allocation0 [shape = 'u32[]', space=smem, size = 0x4, offset = 0x4, fixed_abs, tag = 'smem constant byte address 0x4 - core index']
  #allocation1 [shape = 'u32[144,128]{1,0:T(1,128)}', space=vmem, size = 0x12000, scoped, tag = 'internal scratch']
  %s0 = inlined_call_operand.vmem [shape: bf16[1,32], index: 0, kind: input, shape index: {}]
  %s1 = inlined_call_operand.vmem [shape: bf16[128,32], index: 1, kind: input, shape index: {}]
  %s2 = inlined_call_operand.vmem [shape: f32[1,128], index: 2, kind: output, shape index: {}]
  %s3 = sld [smem:[#allocation0]]
  $region18: #{attention_general.1} parent=0
    _
  %s5 = ssub.s32 1, %s3
  %s6 = scalar_select 0, %s5, %s3
  // Predicated region
  $region2: #{attention_general.1} parent=0 // pred_check
    _
  $region3: #{attention_general.1} parent=0 // pred_check_branch
    %8 = sbr.rel (0) target = $region5
  $region4: #{attention_general.1} parent=0 // pred_region
    _
  $region5: #{attention_general.1} parent=0 // pred_fallthru
    _
  // Predicated region
  $region6: #{attention_general.1} parent=0 // pred_check
    _
  $region7: #{attention_general.1} parent=0 // pred_check_branch
    %10 = sbr.rel (0) target = $region9
  $region8: #{attention_general.1} parent=0 // pred_region
    _
  $region9: #{attention_general.1} parent=0 // pred_fallthru
    _
  %v12 = vld [vmem:[%s0] sm:$0x1]
  %v13 = vld [vmem:[%s1] sm:$0xf]
  %v14 = vld [vmem:[%s1 + $0x4] sm:$0xf]
  %v15 = vld [vmem:[%s1 + $0x8] sm:$0xf]
  %v16 = vld [vmem:[%s1 + $0xc] sm:$0xf]
  %v17 = vld [vmem:[%s1 + $0x10] sm:$0xf]
  %v18 = vld [vmem:[%s1 + $0x14] sm:$0xf]
  %v19 = vld [vmem:[%s1 + $0x18] sm:$0xf]
  %v20 = vld [vmem:[%s1 + $0x1c] sm:$0xf]
  %v21 = vld [vmem:[%s1 + $0x20] sm:$0xf]
  %v22 = vld [vmem:[%s1 + $0x24] sm:$0xf]
  %v23 = vld [vmem:[%s1 + $0x28] sm:$0xf]
  %v24 = vld [vmem:[%s1 + $0x2c] sm:$0xf]
  %v25 = vld [vmem:[%s1 + $0x30] sm:$0xf]
  %v26 = vld [vmem:[%s1 + $0x34] sm:$0xf]
  %v27 = vld [vmem:[%s1 + $0x38] sm:$0xf]
  %v28 = vld [vmem:[%s1 + $0x3c] sm:$0xf]
  %v45 = vunpack.c.l.b16 %v13
  %v46 = vunpack.c.l.b16 %v14
  %v47 = vunpack.c.l.b16 %v15
  %v48 = vunpack.c.l.b16 %v16
  %v49 = vunpack.c.l.b16 %v17
  %v50 = vunpack.c.l.b16 %v18
  %v51 = vunpack.c.l.b16 %v19
  %v52 = vunpack.c.l.b16 %v20
  %v53 = vunpack.c.l.b16 %v21
  %v54 = vunpack.c.l.b16 %v22
  %v55 = vunpack.c.l.b16 %v23
  %v56 = vunpack.c.l.b16 %v24
  %v57 = vunpack.c.l.b16 %v25
  %v58 = vunpack.c.l.b16 %v26
  %v59 = vunpack.c.l.b16 %v27
  %v60 = vunpack.c.l.b16 %v28
  %v61 = vpack.c.b16 %v46, %v45
  %v62 = vpack.c.b16 %v48, %v47
  %v63 = vpack.c.b16 %v50, %v49
  %v64 = vpack.c.b16 %v52, %v51
  %v65 = vpack.c.b16 %v54, %v53
  %v66 = vpack.c.b16 %v56, %v55
  %v67 = vpack.c.b16 %v58, %v57
  %v68 = vpack.c.b16 %v60, %v59
  %vm69 = vcmask 261120
  %v71 = vsel %vm69, %v12, 0
  %v74 = vsel %vm69, %v61, 0
  %v77 = vsel %vm69, %v62, 0
  %v80 = vsel %vm69, %v63, 0
  %v83 = vsel %vm69, %v64, 0
  %v86 = vsel %vm69, %v65, 0
  %v89 = vsel %vm69, %v66, 0
  %v92 = vsel %vm69, %v67, 0
  %v95 = vsel %vm69, %v68, 0
  %97 = vmatprep.subr.bf16.mxu0 0
  %98 = vmatpush1.bf16.xpose.msra.mxu0 %v95
  %99 = vmatprep.subr.bf16.mxu0 0
  %100 = vmatpush1.bf16.xpose.msra.mxu0 %v92
  %101 = vmatprep.subr.bf16.mxu0 0
  %102 = vmatpush1.bf16.xpose.msra.mxu0 %v89
  %103 = vmatprep.subr.bf16.mxu0 0
  %104 = vmatpush1.bf16.xpose.msra.mxu0 %v86
  %105 = vmatprep.subr.bf16.mxu0 0
  %106 = vmatpush1.bf16.xpose.msra.mxu0 %v83
  %107 = vmatprep.subr.bf16.mxu0 0
  %108 = vmatpush1.bf16.xpose.msra.mxu0 %v80
  %109 = vmatprep.subr.bf16.mxu0 0
  %110 = vmatpush1.bf16.xpose.msra.mxu0 %v77
  %111 = vmatprep.subr.bf16.mxu0 0
  %112 = vmatpush1.bf16.xpose.msra.mxu0 %v74
  %113 = vmatprep.subr.bf16.mxu0 0
  %114 = vmatpush2.bf16.xpose.msra.mxu0 0
  %115 = vmatprep.subr.bf16.mxu0 0
  %116 = vmatpush2.bf16.xpose.msra.mxu0 0
  %117 = vmatprep.subr.bf16.mxu0 0
  %118 = vmatpush2.bf16.xpose.msra.mxu0 0
  %119 = vmatprep.subr.bf16.mxu0 0
  %120 = vmatpush2.bf16.xpose.msra.mxu0 0
  %121 = vmatprep.subr.bf16.mxu0 0
  %122 = vmatpush2.bf16.xpose.msra.mxu0 0
  %123 = vmatprep.subr.bf16.mxu0 0
  %124 = vmatpush2.bf16.xpose.msra.mxu0 0
  %125 = vmatprep.subr.bf16.mxu0 0
  %126 = vmatpush2.bf16.xpose.msra.mxu0 0
  %127 = vmatprep.subr.bf16.mxu0 0
  %128 = vmatpush2.bf16.xpose.msra.mxu0 0
  %129 = vmatprep.mubr.bf16.mxu0 0
  %130 = vmatmul.mubr.bf16.gmra.mxu0 %v71
  %v131 = vpop.f32.mrf.mxu0
  %v132 = vadd.f32 0.0, %v131
  %v133 = vpop.f32.mrf.mxu0
  %v134 = vpop.f32.mrf.mxu0
  %v135 = vpop.f32.mrf.mxu0
  %136 = vdwg.mxu0
  %137 = vst [vmem:[%s2] sm:$0x1] %v132
  // Predicated region
  $region10: #{attention_general.1} parent=0 // pred_check
    _
  $region11: #{attention_general.1} parent=0 // pred_check_branch
    %139 = sbr.rel (0) target = $region13
  $region12: #{attention_general.1} parent=0 // pred_region
    _
  $region13: #{attention_general.1} parent=0 // pred_fallthru
    _
  // Predicated region
  $region14: #{attention_general.1} parent=0 // pred_check
    _
  $region15: #{attention_general.1} parent=0 // pred_check_branch
    %141 = sbr.rel (0) target = $region17
  $region16: #{attention_general.1} parent=0 // pred_region
    _
  $region17: #{attention_general.1} parent=0 // pred_fallthru
    _

</llo_original>
